<compile_context>
chip_gen: v5e
topology: v5e:2x2
jax: 0.10.0
libtpu: 0.0.40
codegen_flags: <defaults>
</compile_context>

<pallas_src>
import functools

import jax
import jax.numpy as jnp
from jax.experimental import pallas as pl
from jax.experimental.pallas import tpu as pltpu


def _round_up(x, m):
    return ((x + m - 1) // m) * m


def _mix32(h):
    """murmur3-style 32-bit finalizer (good avalanche for sequential counters)."""
    h = h ^ (h >> 16)
    h = h * jnp.uint32(0x7FEB352D)
    h = h ^ (h >> 15)
    h = h * jnp.uint32(0x846CA68B)
    h = h ^ (h >> 16)
    return h


def _discriminator_kernel(seed_ref, x_ref, w1_ref, b1_ref, w2_ref, b2_ref,
                          o_ref, *, training, dropout_p, tile_b):
    """dropout -> linear+relu -> linear+sigmoid on one batch tile."""
    x = x_ref[...].astype(jnp.float32)          # [tile_b, IN]

    if training and dropout_p > 0.0:
        # Counter-based hash PRNG: hash(global element index ^ f(seed)).
        # Works on TPU and in interpret mode; independent per tile because the
        # tile index is folded into the global row index.
        tile = pl.program_id(0).astype(jnp.uint32)
        rows = jax.lax.broadcasted_iota(jnp.uint32, x.shape, 0)
        cols = jax.lax.broadcasted_iota(jnp.uint32, x.shape, 1)
        g_idx = (tile * jnp.uint32(tile_b) + rows) * jnp.uint32(x.shape[1]) + cols
        seed_u = seed_ref[0].astype(jnp.uint32) * jnp.uint32(0x9E3779B9)
        bits = _mix32(g_idx ^ seed_u)
        # Drop with probability p: one compare + one multiply per vreg.
        threshold = jnp.uint32(int(dropout_p * (2.0 ** 32)))
        keep = (bits >= threshold).astype(jnp.float32)
        x = x * (keep * jnp.float32(1.0 / (1.0 - dropout_p)))

    # map1 + ReLU: bf16 MXU matmul, f32 accumulation, f32 elementwise.
    xb = x.astype(jnp.bfloat16)
    h = jnp.dot(xb, w1_ref[...], preferred_element_type=jnp.float32)
    h = jnp.maximum(h + b1_ref[...], 0.0)       # [tile_b, H_pad]

    # map2 + Sigmoid.
    z = jnp.dot(h.astype(jnp.bfloat16), w2_ref[...],
                preferred_element_type=jnp.float32)
    z = z + b2_ref[...]                          # [tile_b, O_pad]
    # TODO(synk): pl.reciprocal(approx=True) would move the divide to the EUP
    # slot, but it lacks an interpret-mode lowering; keep the plain form.
    o_ref[...] = (1.0 / (1.0 + jnp.exp(-z))).astype(o_ref.dtype)


def prepare_params(w1, b1, w2, b2):
    """Torch-layout params -> kernel layout (done ONCE, not per forward).

    w1: [hidden, in], b1: [hidden], w2: [out, hidden], b2: [out]
    Returns (w1_t, b1_r, w2_t, b2_r) with:
      w1_t: bf16 [in, H_pad], w2_t: bf16 [H_pad, O_pad] (zero padded),
      b1_r: f32  [1, H_pad],  b2_r: f32  [1, O_pad].
    """
    hidden, in_size = w1.shape
    out_size = w2.shape[0]
    h_pad = _round_up(hidden, 128)
    o_pad = _round_up(out_size, 128)

    w1_t = jnp.zeros((in_size, h_pad), jnp.bfloat16)
    w1_t = w1_t.at[:, :hidden].set(jnp.asarray(w1, jnp.float32).T.astype(jnp.bfloat16))
    b1_r = jnp.zeros((1, h_pad), jnp.float32).at[0, :hidden].set(
        jnp.asarray(b1, jnp.float32))
    w2_t = jnp.zeros((h_pad, o_pad), jnp.bfloat16)
    w2_t = w2_t.at[:hidden, :out_size].set(
        jnp.asarray(w2, jnp.float32).T.astype(jnp.bfloat16))
    b2_r = jnp.zeros((1, o_pad), jnp.float32).at[0, :out_size].set(
        jnp.asarray(b2, jnp.float32))
    return (w1_t, b1_r, w2_t, b2_r), (hidden, out_size)


def _choose_tile_b(batch, in_size, h_pad, o_pad, budget_bytes=32 << 20):
    """Largest batch tile (multiple of 16 for bf16 sublane packing) under budget."""
    weight_bytes = (in_size * h_pad + h_pad * o_pad) * 2 + (h_pad + o_pad) * 4
    tile_b = 512
    while tile_b > 16:
        io = 2 * tile_b * in_size * 2 + 2 * tile_b * o_pad * 4      # dbl-buffered x / out
        inter = tile_b * (in_size * 4 + h_pad * 6 + o_pad * 4)       # f32 x, h (f32+bf16), z
        if weight_bytes + io + inter <= budget_bytes:
            break
        tile_b //= 2
    return min(tile_b, _round_up(batch, 16))


def discriminator_forward(x, params, output_size, *, training=True,
                          dropout_p=0.5, seed=0):
    """x: [B, input_size] (any float dtype); params from prepare_params()."""
    w1_t, b1_r, w2_t, b2_r = params
    B, in_size = x.shape
    h_pad = w1_t.shape[1]
    o_pad = w2_t.shape[1]

    tile_b = _choose_tile_b(B, in_size, h_pad, o_pad)
    b_pad = _round_up(max(B, tile_b), tile_b)

    # bf16 x halves HBM->VMEM traffic (the dominant bytes in the mem-bound case).
    x_b = jnp.zeros((b_pad, in_size), jnp.bfloat16)
    x_b = x_b.at[:B].set(jnp.asarray(x).astype(jnp.bfloat16))
    seed_arr = jnp.array([seed], dtype=jnp.int32)

    kernel = functools.partial(_discriminator_kernel,
                               training=bool(training),
                               dropout_p=float(dropout_p),
                               tile_b=tile_b)

    # Explicit VMEM budget: dbl-buffered tiles + resident weights + headroom,
    # capped at 48 MiB so it is valid on v7x (64 MiB physical) as well.
    weight_bytes = (in_size * h_pad + h_pad * o_pad) * 2 + (h_pad + o_pad) * 4
    io_bytes = 2 * tile_b * in_size * 2 + 2 * tile_b * o_pad * 4
    inter_bytes = tile_b * (in_size * 4 + h_pad * 6 + o_pad * 4)
    vmem_limit = int(min(max(weight_bytes + io_bytes + inter_bytes + (8 << 20),
                             16 << 20), 48 << 20))

    grid = (b_pad // tile_b,)
    out = pl.pallas_call(
        kernel,
        out_shape=jax.ShapeDtypeStruct((b_pad, o_pad), jnp.float32),
        grid_spec=pltpu.PrefetchScalarGridSpec(
            num_scalar_prefetch=1,          # seed -> SMEM
            grid=grid,
            in_specs=[
                pl.BlockSpec((tile_b, in_size), lambda i, seed: (i, 0)),  # x tile
                pl.BlockSpec((in_size, h_pad), lambda i, seed: (0, 0)),   # W1^T (resident)
                pl.BlockSpec((1, h_pad), lambda i, seed: (0, 0)),         # b1
                pl.BlockSpec((h_pad, o_pad), lambda i, seed: (0, 0)),     # W2^T (resident)
                pl.BlockSpec((1, o_pad), lambda i, seed: (0, 0)),         # b2
            ],
            out_specs=pl.BlockSpec((tile_b, o_pad), lambda i, seed: (i, 0)),
        ),
        compiler_params=pltpu.CompilerParams(
            dimension_semantics=("parallel",),
            vmem_limit_bytes=vmem_limit,
        ),
    )(seed_arr, x_b, w1_t, b1_r, w2_t, b2_r)

    return out[:B, :output_size]


def init_discriminator_params(key, input_size, hidden_size, output_size):
    """nn.Linear default init U(-1/sqrt(fan_in), 1/sqrt(fan_in)), torch layout."""
    k1, k2, k3, k4 = jax.random.split(key, 4)
    lim1 = 1.0 / jnp.sqrt(jnp.float32(input_size))
    lim2 = 1.0 / jnp.sqrt(jnp.float32(hidden_size))
    w1 = jax.random.uniform(k1, (hidden_size, input_size), jnp.float32, -lim1, lim1)
    b1 = jax.random.uniform(k2, (hidden_size,), jnp.float32, -lim1, lim1)
    w2 = jax.random.uniform(k3, (output_size, hidden_size), jnp.float32, -lim2, lim2)
    b2 = jax.random.uniform(k4, (output_size,), jnp.float32, -lim2, lim2)
    return w1, b1, w2, b2


if __name__ == "__main__":
    # Small shapes consistent with Discriminator(input_size, hidden_size, output_size).
    batch = 8
    input_size, hidden_size, output_size = 16, 32, 8

    key = jax.random.PRNGKey(0)
    k_x, k_p = jax.random.split(key)
    x = jax.random.normal(k_x, (batch, input_size), jnp.float32)
    w1, b1, w2, b2 = init_discriminator_params(k_p, input_size, hidden_size, output_size)
    params, _ = prepare_params(w1, b1, w2, b2)

    # Module default state is training=True -> dropout active.
    out = discriminator_forward(x, params, output_size, training=True, seed=0)
    out = jax.block_until_ready(out)
    assert out.shape == (batch, output_size)
    assert bool(jnp.all((out >= 0.0) & (out <= 1.0)))   # sigmoid range sanity

    # Eval mode (no dropout) against a pure-JAX f32 reference; bf16 matmul tolerance.
    out_eval = discriminator_forward(x, params, output_size, training=False)
    out_eval = jax.block_until_ready(out_eval)
    ref = jax.nn.sigmoid(jnp.maximum(x @ w1.T + b1, 0.0) @ w2.T + b2)
    assert jnp.allclose(out_eval, ref, atol=3e-2, rtol=3e-2)

    print("KERNEL_OK")
</pallas_src>

<mosaic_0001>
module attributes {stable_mosaic.version = 11 : i64} {
  func.func @_discriminator_kernel(%arg0: i32, %arg1: memref<1xi32, #tpu.memory_space<smem>>, %arg2: memref<16x16xbf16, #tpu.memory_space<vmem>>, %arg3: memref<16x128xbf16, #tpu.memory_space<vmem>>, %arg4: memref<1x128xf32, #tpu.memory_space<vmem>>, %arg5: memref<128x128xbf16, #tpu.memory_space<vmem>>, %arg6: memref<1x128xf32, #tpu.memory_space<vmem>>, %arg7: memref<16x128xf32, #tpu.memory_space<vmem>>) attributes {dimension_semantics = [#tpu.dimension_semantics<parallel>], iteration_bounds = array<i64: 1>, scalar_prefetch = 1 : i64, scratch_operands = 0 : i64, tpu.core_type = #tpu.core_type<tc>, window_params = [{transform_indices = @transform_0, window_bounds = array<i64: 16, 16>}, {pipeline_mode = #tpu.pipeline_mode<synchronous>, transform_indices = @transform_1, window_bounds = array<i64: 16, 128>}, {pipeline_mode = #tpu.pipeline_mode<synchronous>, transform_indices = @transform_2, window_bounds = array<i64: 1, 128>}, {pipeline_mode = #tpu.pipeline_mode<synchronous>, transform_indices = @transform_3, window_bounds = array<i64: 128, 128>}, {pipeline_mode = #tpu.pipeline_mode<synchronous>, transform_indices = @transform_4, window_bounds = array<i64: 1, 128>}, {transform_indices = @transform_5, window_bounds = array<i64: 16, 128>}]} {
    %c0 = arith.constant 0 : index
    %c0_0 = arith.constant 0 : index
    %0 = vector.load %arg2[%c0, %c0_0] : memref<16x16xbf16, #tpu.memory_space<vmem>>, vector<16x16xbf16>
    %1 = arith.extf %0 : vector<16x16xbf16> to vector<16x16xf32>
    %2 = tpu.iota {dimensions = array<i32: 0>} : vector<16x16xi32>
    %3 = tpu.iota {dimensions = array<i32: 1>} : vector<16x16xi32>
    %c16_i32 = arith.constant 16 : i32
    %4 = arith.muli %arg0, %c16_i32 : i32
    %5 = vector.broadcast %4 : i32 to vector<16x16xi32>
    %6 = arith.addi %5, %2 : vector<16x16xi32>
    %c16_i32_1 = arith.constant 16 : i32
    %7 = vector.broadcast %c16_i32_1 : i32 to vector<16x16xi32>
    %8 = arith.muli %6, %7 : vector<16x16xi32>
    %9 = arith.addi %8, %3 : vector<16x16xi32>
    %c0_2 = arith.constant 0 : index
    %10 = memref.load %arg1[%c0_2] : memref<1xi32, #tpu.memory_space<smem>>
    %c-1640531527_i32 = arith.constant -1640531527 : i32
    %11 = arith.muli %10, %c-1640531527_i32 : i32
    %12 = vector.broadcast %11 : i32 to vector<16x16xi32>
    %13 = arith.xori %9, %12 : vector<16x16xi32>
    %c16_i32_3 = arith.constant 16 : i32
    %14 = vector.broadcast %c16_i32_3 : i32 to vector<16x16xi32>
    %15 = arith.shrui %13, %14 : vector<16x16xi32>
    %16 = arith.xori %13, %15 : vector<16x16xi32>
    %c2146121005_i32 = arith.constant 2146121005 : i32
    %17 = vector.broadcast %c2146121005_i32 : i32 to vector<16x16xi32>
    %18 = arith.muli %16, %17 : vector<16x16xi32>
    %c15_i32 = arith.constant 15 : i32
    %19 = vector.broadcast %c15_i32 : i32 to vector<16x16xi32>
    %20 = arith.shrui %18, %19 : vector<16x16xi32>
    %21 = arith.xori %18, %20 : vector<16x16xi32>
    %c-2073254261_i32 = arith.constant -2073254261 : i32
    %22 = vector.broadcast %c-2073254261_i32 : i32 to vector<16x16xi32>
    %23 = arith.muli %21, %22 : vector<16x16xi32>
    %c16_i32_4 = arith.constant 16 : i32
    %24 = vector.broadcast %c16_i32_4 : i32 to vector<16x16xi32>
    %25 = arith.shrui %23, %24 : vector<16x16xi32>
    %26 = arith.xori %23, %25 : vector<16x16xi32>
    %c-2147483648_i32 = arith.constant -2147483648 : i32
    %27 = vector.broadcast %c-2147483648_i32 : i32 to vector<16x16xi32>
    %28 = arith.cmpi uge, %26, %27 : vector<16x16xi32>
    %29 = arith.extui %28 : vector<16x16xi1> to vector<16x16xi32>
    %30 = arith.sitofp %29 : vector<16x16xi32> to vector<16x16xf32>
    %cst = arith.constant 2.000000e+00 : f32
    %31 = vector.broadcast %cst : f32 to vector<16x16xf32>
    %32 = arith.mulf %30, %31 : vector<16x16xf32>
    %33 = arith.mulf %1, %32 : vector<16x16xf32>
    %34 = arith.truncf %33 : vector<16x16xf32> to vector<16x16xbf16>
    %c0_5 = arith.constant 0 : index
    %c0_6 = arith.constant 0 : index
    %35 = vector.load %arg3[%c0_5, %c0_6] : memref<16x128xbf16, #tpu.memory_space<vmem>>, vector<16x128xbf16>
    %cst_7 = arith.constant dense<0.000000e+00> : vector<16x128xf32>
    %36 = tpu.matmul %34, %35, %cst_7 {dimension_numbers = #tpu.dot_dimension_numbers<[1], [0], [0], [1], [0, 0, 1, 1], [], []>} : vector<16x16xbf16>, vector<16x128xbf16>, vector<16x128xf32> -> vector<16x128xf32>
    %c0_8 = arith.constant 0 : index
    %c0_9 = arith.constant 0 : index
    %37 = vector.load %arg4[%c0_8, %c0_9] : memref<1x128xf32, #tpu.memory_space<vmem>>, vector<1x128xf32>
    %38 = vector.broadcast %37 : vector<1x128xf32> to vector<16x128xf32>
    %39 = arith.addf %36, %38 : vector<16x128xf32>
    %cst_10 = arith.constant 0.000000e+00 : f32
    %40 = vector.broadcast %cst_10 : f32 to vector<16x128xf32>
    %41 = arith.maximumf %39, %40 : vector<16x128xf32>
    %42 = arith.truncf %41 : vector<16x128xf32> to vector<16x128xbf16>
    %c0_11 = arith.constant 0 : index
    %c0_12 = arith.constant 0 : index
    %43 = vector.load %arg5[%c0_11, %c0_12] : memref<128x128xbf16, #tpu.memory_space<vmem>>, vector<128x128xbf16>
    %cst_13 = arith.constant dense<0.000000e+00> : vector<16x128xf32>
    %44 = tpu.matmul %42, %43, %cst_13 {dimension_numbers = #tpu.dot_dimension_numbers<[1], [0], [0], [1], [0, 0, 1, 1], [], []>} : vector<16x128xbf16>, vector<128x128xbf16>, vector<16x128xf32> -> vector<16x128xf32>
    %c0_14 = arith.constant 0 : index
    %c0_15 = arith.constant 0 : index
    %45 = vector.load %arg6[%c0_14, %c0_15] : memref<1x128xf32, #tpu.memory_space<vmem>>, vector<1x128xf32>
    %46 = vector.broadcast %45 : vector<1x128xf32> to vector<16x128xf32>
    %47 = arith.addf %44, %46 : vector<16x128xf32>
    %cst_16 = arith.constant 0.000000e+00 : f32
    %48 = vector.broadcast %cst_16 : f32 to vector<16x128xf32>
    %49 = arith.subf %48, %47 : vector<16x128xf32>
    %50 = math.exp %49 : vector<16x128xf32>
    %cst_17 = arith.constant 1.000000e+00 : f32
    %51 = vector.broadcast %cst_17 : f32 to vector<16x128xf32>
    %52 = arith.addf %51, %50 : vector<16x128xf32>
    %cst_18 = arith.constant 1.000000e+00 : f32
    %53 = vector.broadcast %cst_18 : f32 to vector<16x128xf32>
    %54 = arith.divf %53, %52 : vector<16x128xf32>
    %c0_19 = arith.constant 0 : index
    %c0_20 = arith.constant 0 : index
    %55 = vector.load %arg7[%c0_19, %c0_20] : memref<16x128xf32, #tpu.memory_space<vmem>>, vector<16x128xf32>
    tpu.vector_store %arg7[%c0_19, %c0_20], %54 {strides = array<i32>} : memref<16x128xf32, #tpu.memory_space<vmem>>, vector<16x128xf32>,
    return
  }
  func.func @transform_0(%arg0: i32, %arg1: memref<1xi32, #tpu.memory_space<smem>>) -> (i32, i32) {
    %c0_i32 = arith.constant 0 : i32
    %c0_i32_0 = arith.constant 0 : i32
    return %arg0, %c0_i32 : i32, i32
  }
  func.func @transform_1(%arg0: i32, %arg1: memref<1xi32, #tpu.memory_space<smem>>) -> (i32, i32) {
    %c0_i32 = arith.constant 0 : i32
    %c0_i32_0 = arith.constant 0 : i32
    %c0_i32_1 = arith.constant 0 : i32
    return %c0_i32, %c0_i32_0 : i32, i32
  }
  func.func @transform_2(%arg0: i32, %arg1: memref<1xi32, #tpu.memory_space<smem>>) -> (i32, i32) {
    %c0_i32 = arith.constant 0 : i32
    %c0_i32_0 = arith.constant 0 : i32
    %c0_i32_1 = arith.constant 0 : i32
    return %c0_i32, %c0_i32_0 : i32, i32
  }
  func.func @transform_3(%arg0: i32, %arg1: memref<1xi32, #tpu.memory_space<smem>>) -> (i32, i32) {
    %c0_i32 = arith.constant 0 : i32
    %c0_i32_0 = arith.constant 0 : i32
    %c0_i32_1 = arith.constant 0 : i32
    return %c0_i32, %c0_i32_0 : i32, i32
  }
  func.func @transform_4(%arg0: i32, %arg1: memref<1xi32, #tpu.memory_space<smem>>) -> (i32, i32) {
    %c0_i32 = arith.constant 0 : i32
    %c0_i32_0 = arith.constant 0 : i32
    %c0_i32_1 = arith.constant 0 : i32
    return %c0_i32, %c0_i32_0 : i32, i32
  }
  func.func @transform_5(%arg0: i32, %arg1: memref<1xi32, #tpu.memory_space<smem>>) -> (i32, i32) {
    %c0_i32 = arith.constant 0 : i32
    %c0_i32_0 = arith.constant 0 : i32
    return %arg0, %c0_i32 : i32, i32
  }
}

</mosaic_0001>

<llo_original>
// kernel: tpu_custom_call.1
$region0: #{tpu_custom_call.1}
  #allocation0 [shape = 'u32[]', space=smem, size = 0x4, offset = 0x4, fixed_abs, tag = 'smem constant byte address 0x4 - core index']
  #allocation1 [shape = 'u32[72,128]{1,0:T(1,128)}', space=vmem, size = 0x9000, scoped, tag = 'internal scratch']
  #allocation2 [shape = 's32[1]{0}', space=sflag, size = 0x4, scoped, tag = 'scoped memory for tpu_custom_call.1']
  #allocation3 [shape = 's32[1]{0:T(128)S(6)}', space=smem, size = 0x200, scoped, tag = 'prefetched SMEM operand 0']
  %s0 = inlined_call_operand.<no memory space> [shape: s32[1], index: 0, kind: input, shape index: {}]
  %s1 = inlined_call_operand.hbm [shape: bf16[16,16], index: 1, kind: input, shape index: {}]
  %s2 = inlined_call_operand.hbm [shape: bf16[16,128], index: 2, kind: input, shape index: {}]
  %s3 = inlined_call_operand.vmem [shape: f32[1,128], index: 3, kind: input, shape index: {}]
  %s4 = inlined_call_operand.hbm [shape: bf16[128,128], index: 4, kind: input, shape index: {}]
  %s5 = inlined_call_operand.vmem [shape: f32[1,128], index: 5, kind: input, shape index: {}]
  %s6 = inlined_call_operand.hbm [shape: f32[16,128], index: 6, kind: output, shape index: {}]
  %s7 = sld [smem:[#allocation0]]
  $region42: #{tpu_custom_call.1} parent=0
    _
  %s9 = ssub.s32 1, %s7
  %s10 = scalar_select 0, %s9, %s7
  %11 = sst [smem:[#allocation3]] %s0
  $region1: #{tpu_custom_call.1} parent=0
    #allocation4 [shape = 'u8[4096]{0}', space=vmem, size = 0x1000, scoped, tag = 'input window, operand 1, single buffered']
    #allocation5 [shape = 's32[1]{0}', space=sflag, size = 0x4, scoped, tag = 'scoped memory for tpu_custom_call.1']
    #allocation6 [shape = 's32[1]{0}', space=sflag, size = 0x4, scoped, tag = 'scoped memory for tpu_custom_call.1']
    #allocation7 [shape = 'u8[4096]{0}', space=vmem, size = 0x1000, scoped, tag = 'input window, operand 2, single buffered']
    #allocation8 [shape = 's32[1]{0}', space=sflag, size = 0x4, scoped, tag = 'scoped memory for tpu_custom_call.1']
    #allocation9 [shape = 'u8[32768]{0}', space=vmem, size = 0x8000, scoped, tag = 'input window, operand 4, single buffered']
    #allocation10 [shape = 'u8[8192]{0}', space=vmem, size = 0x2000, scoped, tag = 'output window, operand 0, single buffered']
    %12 = vsyncpa [#allocation5], 0
    %13 = vsyncpa [#allocation8], 0
    %14 = vsyncpa [#allocation6], 0
    // Predicated region
    $region2: #{tpu_custom_call.1} parent=1 // pred_check
      _
    $region3: #{tpu_custom_call.1} parent=1 // pred_check_branch
      %16 = sbr.rel (0) target = $region5
    $region4: #{tpu_custom_call.1} parent=1 // pred_region
      %18 = vsyncadd [#allocation5], 0
      %s19 = sshll.u32 %s1, 4
      %s20 = int_to_ptr.hbm [resolvable:$true] %s19
      %s21 = sshll.u32 [#allocation4], 4
      %s22 = int_to_ptr.vmem [resolvable:$true] %s21
      %27 = dma.hbm_to_vmem [thread:$0]  %s20, 128, %s22, [#allocation5], 64, 64, 4
    $region5: #{tpu_custom_call.1} parent=1 // pred_fallthru
      _
    // Predicated region
    $region6: #{tpu_custom_call.1} parent=1 // pred_check
      _
    $region7: #{tpu_custom_call.1} parent=1 // pred_check_branch
      %29 = sbr.rel (0) target = $region9
    $region8: #{tpu_custom_call.1} parent=1 // pred_region
      %31 = vsyncadd [#allocation8], 0
      %s32 = sshll.u32 %s2, 4
      %s33 = int_to_ptr.hbm [resolvable:$true] %s32
      %s34 = sshll.u32 [#allocation7], 4
      %s35 = int_to_ptr.vmem [resolvable:$true] %s34
      %40 = dma.hbm_to_vmem [thread:$0]  %s33, 128, %s35, [#allocation8], 64, 64, 4
    $region9: #{tpu_custom_call.1} parent=1 // pred_fallthru
      _
    // Predicated region
    $region10: #{tpu_custom_call.1} parent=1 // pred_check
      _
    $region11: #{tpu_custom_call.1} parent=1 // pred_check_branch
      %42 = sbr.rel (0) target = $region13
    $region12: #{tpu_custom_call.1} parent=1 // pred_region
      _
    $region13: #{tpu_custom_call.1} parent=1 // pred_fallthru
      _
    // Predicated region
    $region14: #{tpu_custom_call.1} parent=1 // pred_check
      _
    $region15: #{tpu_custom_call.1} parent=1 // pred_check_branch
      %44 = sbr.rel (0) target = $region17
    $region16: #{tpu_custom_call.1} parent=1 // pred_region
      %46 = vsyncadd [#allocation8], 0
      %s47 = sshll.u32 %s4, 4
      %s48 = int_to_ptr.hbm [resolvable:$true] %s47
      %s49 = sshll.u32 [#allocation9], 4
      %s50 = int_to_ptr.vmem [resolvable:$true] %s49
      %55 = dma.hbm_to_vmem [thread:$0]  %s48, 1024, %s50, [#allocation8], 64, 64, 4
    $region17: #{tpu_custom_call.1} parent=1 // pred_fallthru
      _
    // Predicated region
    $region18: #{tpu_custom_call.1} parent=1 // pred_check
      _
    $region19: #{tpu_custom_call.1} parent=1 // pred_check_branch
      %57 = sbr.rel (0) target = $region21
    $region20: #{tpu_custom_call.1} parent=1 // pred_region
      _
    $region21: #{tpu_custom_call.1} parent=1 // pred_fallthru
      _
    // Predicated region
    $region22: #{tpu_custom_call.1} parent=1 // pred_check
      _
    $region23: #{tpu_custom_call.1} parent=1 // pred_check_branch
      %59 = sbr.rel (0) target = $region25
    $region24: #{tpu_custom_call.1} parent=1 // pred_region
      %61 = dma.done [#allocation5], 128
    $region25: #{tpu_custom_call.1} parent=1 // pred_fallthru
      _
    // Predicated region
    $region26: #{tpu_custom_call.1} parent=1 // pred_check
      _
    $region27: #{tpu_custom_call.1} parent=1 // pred_check_branch
      %63 = sbr.rel (0) target = $region29
    $region28: #{tpu_custom_call.1} parent=1 // pred_region
      %65 = dma.done [#allocation8], 128
    $region29: #{tpu_custom_call.1} parent=1 // pred_fallthru
      _
    // Predicated region
    $region30: #{tpu_custom_call.1} parent=1 // pred_check
      _
    $region31: #{tpu_custom_call.1} parent=1 // pred_check_branch
      %67 = sbr.rel (0) target = $region33
    $region32: #{tpu_custom_call.1} parent=1 // pred_region
      %69 = dma.done [#allocation8], 1024
    $region33: #{tpu_custom_call.1} parent=1 // pred_fallthru
      _
    %v71 = vld [vmem:[#allocation4] sm:$0xf]
    %v72 = vld [vmem:[#allocation4 + $0x4] sm:$0xf]
    %v73 = vunpack.c.l.bf16 %v71
    %v74 = vunpack.c.l.bf16 %v72
    %v75 = vlaneseq
    %v76 = vshrl.u32 %v75, 7
    %v77 = vadd.s32 %v76, 8
    %v78 = vlaneseq
    %v79 = vand.u32 %v78, 127
    %s80 = smul.u32 0, 16
    %v81 = vstv %s80
    %v82 = vadd.s32 %v81, %v76
    %v83 = vadd.s32 %v81, %v77
    %v84 = vmul.u32 %v82, 16
    %v85 = vmul.u32 %v83, 16
    %v86 = vadd.s32 %v84, %v79
    %v87 = vadd.s32 %v85, %v79
    %s88 = sld [smem:[#allocation3]]
    %s89 = smul.u32 %s88, 2654435769
    %v90 = vstv %s89
    %v91 = vxor.u32 %v86, %v90
    %v92 = vxor.u32 %v87, %v90
    %v93 = vshrl.u32 %v91, 16
    %v94 = vshrl.u32 %v92, 16
    %v95 = vxor.u32 %v91, %v93
    %v96 = vxor.u32 %v92, %v94
    %v97 = vmul.u32 %v95, 2146121005
    %v98 = vmul.u32 %v96, 2146121005
    %v99 = vshrl.u32 %v97, 15
    %v100 = vshrl.u32 %v98, 15
    %v101 = vxor.u32 %v97, %v99
    %v102 = vxor.u32 %v98, %v100
    %v103 = vmul.u32 %v101, 2221713035
    %v104 = vmul.u32 %v102, 2221713035
    %v105 = vshrl.u32 %v103, 16
    %v106 = vshrl.u32 %v104, 16
    %v107 = vxor.u32 %v103, %v105
    %v108 = vxor.u32 %v104, %v106
    %v109 = vadd.s32 %v107, 2147483648
    %vm111 = vcmp.ge.s32.totalorder %v109, 0
    %v112 = vadd.s32 %v108, 2147483648
    %vm114 = vcmp.ge.s32.totalorder %v112, 0
    %v115 = vsel %vm111, 1, 0
    %v116 = vsel %vm114, 1, 0
    %v117 = vcvt.s32.f32 %v115
    %v118 = vcvt.s32.f32 %v116
    %v119 = vmul.f32 %v117, 2.0
    %v120 = vmul.f32 %v118, 2.0
    %v121 = vmul.f32 %v73, %v119
    %v122 = vmul.f32 %v74, %v120
    %v123 = vpack.c.bf16 %v122, %v121
    %v124 = vld [vmem:[#allocation7] sm:$0xf]
    %v125 = vld [vmem:[#allocation7 + $0x4] sm:$0xf]
    %v126 = vld [vmem:[%s3] sm:$0x1]
    %v128 = vperm.slane %v126, 0
    %v132 = vunpack.c.l.b16 %v124
    %v133 = vunpack.c.l.b16 %v125
    %v134 = vpack.c.b16 %v133, %v132
    %vm136 = vcmask 130048
    %v138 = vsel %vm136, %v123, 0
    %140 = vmatpush.bf16.msra.mxu0 0
    %141 = vmatpush.bf16.msra.mxu0 0
    %142 = vmatpush.bf16.msra.mxu0 0
    %143 = vmatpush.bf16.msra.mxu0 0
    %144 = vmatpush.bf16.msra.mxu0 0
    %145 = vmatpush.bf16.msra.mxu0 0
    %146 = vmatpush.bf16.msra.mxu0 0
    %147 = vmatpush.bf16.msra.mxu0 %v134
    %148 = vmatmul.bf16.gmra.mxu0 %v138
    %v149 = vpop.f32.mrf.mxu0
    %v150 = vadd.f32 %v128, %v149
    %v151 = vpop.f32.mrf.mxu0
    %v152 = vadd.f32 %v128, %v151
    %153 = vdwg.mxu0
    %v154 = vmax.f32 %v150, 0.0
    %v155 = vmax.f32 %v152, 0.0
    %v156 = vpack.c.bf16 %v155, %v154
    %v157 = vld [vmem:[#allocation9] sm:$0xf]
    %v158 = vld [vmem:[#allocation9 + $0x4] sm:$0xf]
    %v159 = vld [vmem:[#allocation9 + $0x8] sm:$0xf]
    %v160 = vld [vmem:[#allocation9 + $0xc] sm:$0xf]
    %v161 = vld [vmem:[#allocation9 + $0x10] sm:$0xf]
    %v162 = vld [vmem:[#allocation9 + $0x14] sm:$0xf]
    %v163 = vld [vmem:[#allocation9 + $0x18] sm:$0xf]
    %v164 = vld [vmem:[#allocation9 + $0x1c] sm:$0xf]
    %v165 = vld [vmem:[#allocation9 + $0x20] sm:$0xf]
    %v166 = vld [vmem:[#allocation9 + $0x24] sm:$0xf]
    %v167 = vld [vmem:[#allocation9 + $0x28] sm:$0xf]
    %v168 = vld [vmem:[#allocation9 + $0x2c] sm:$0xf]
    %v169 = vld [vmem:[#allocation9 + $0x30] sm:$0xf]
    %v170 = vld [vmem:[#allocation9 + $0x34] sm:$0xf]
    %v171 = vld [vmem:[#allocation9 + $0x38] sm:$0xf]
    %v172 = vld [vmem:[#allocation9 + $0x3c] sm:$0xf]
    %v173 = vld [vmem:[%s5] sm:$0x1]
    %v175 = vperm.slane %v173, 0
    %v193 = vunpack.c.l.b16 %v157
    %v194 = vunpack.c.l.b16 %v158
    %v195 = vunpack.c.l.b16 %v159
    %v196 = vunpack.c.l.b16 %v160
    %v197 = vunpack.c.l.b16 %v161
    %v198 = vunpack.c.l.b16 %v162
    %v199 = vunpack.c.l.b16 %v163
    %v200 = vunpack.c.l.b16 %v164
    %v201 = vunpack.c.l.b16 %v165
    %v202 = vunpack.c.l.b16 %v166
    %v203 = vunpack.c.l.b16 %v167
    %v204 = vunpack.c.l.b16 %v168
    %v205 = vunpack.c.l.b16 %v169
    %v206 = vunpack.c.l.b16 %v170
    %v207 = vunpack.c.l.b16 %v171
    %v208 = vunpack.c.l.b16 %v172
    %v209 = vpack.c.b16 %v194, %v193
    %v210 = vpack.c.b16 %v196, %v195
    %v211 = vpack.c.b16 %v198, %v197
    %v212 = vpack.c.b16 %v200, %v199
    %v213 = vpack.c.b16 %v202, %v201
    %v214 = vpack.c.b16 %v204, %v203
    %v215 = vpack.c.b16 %v206, %v205
    %v216 = vpack.c.b16 %v208, %v207
    %225 = vmatpush.bf16.msra.mxu0 %v216
    %226 = vmatpush.bf16.msra.mxu0 %v215
    %227 = vmatpush.bf16.msra.mxu0 %v214
    %228 = vmatpush.bf16.msra.mxu0 %v213
    %229 = vmatpush.bf16.msra.mxu0 %v212
    %230 = vmatpush.bf16.msra.mxu0 %v211
    %231 = vmatpush.bf16.msra.mxu0 %v210
    %232 = vmatpush.bf16.msra.mxu0 %v209
    %233 = vmatmul.bf16.gmra.mxu0 %v156
    %v234 = vpop.f32.mrf.mxu0
    %v235 = vadd.f32 %v175, %v234
    %v236 = vpop.f32.mrf.mxu0
    %v237 = vadd.f32 %v175, %v236
    %238 = vdwg.mxu0
    %v239 = vsub.f32 0.0, %v235
    %v240 = vsub.f32 0.0, %v237
    %v241 = vmul.f32 %v239, 1.442695
    %v242 = vpow.pop %v241
    %v243 = vmul.f32 %v240, 1.442695
    %v244 = vpow.pop %v243
    %v245 = vadd.f32 %v242, 1.0
    %v246 = vadd.f32 %v244, 1.0
    %v247 = vrcp.pop %v245
    %v248 = vmul.f32 %v245, %v247
    %v249 = vsub.f32 1.0, %v248
    %v250 = vmul.f32 %v247, %v249
    %v251 = vadd.f32 %v247, %v250
    %vm252 = vweird.f32 %v245
    %vm253 = vweird.f32 %v247
    %vm254 = vmor %vm252, %vm253
    %v255 = vsel %vm254, %v247, %v251
    %v256 = vand.u32 2147483647, %v245
    %vm257 = vcmp.eq.f32.partialorder %v256, 8.507059e+37
    %v258 = vand.u32 %v245, 2147483648
    %v259 = vor.u32 1.1754944e-38, %v258
    %v260 = vsel %vm257, %v259, %v255
    %v261 = vmul.f32 1.0, %v260
    %v262 = vrcp.pop %v246
    %v263 = vmul.f32 %v246, %v262
    %v264 = vsub.f32 1.0, %v263
    %v265 = vmul.f32 %v262, %v264
    %v266 = vadd.f32 %v262, %v265
    %vm267 = vweird.f32 %v246
    %vm268 = vweird.f32 %v262
    %vm269 = vmor %vm267, %vm268
    %v270 = vsel %vm269, %v262, %v266
    %v271 = vand.u32 2147483647, %v246
    %vm272 = vcmp.eq.f32.partialorder %v271, 8.507059e+37
    %v273 = vand.u32 %v246, 2147483648
    %v274 = vor.u32 1.1754944e-38, %v273
    %v275 = vsel %vm272, %v274, %v270
    %v276 = vmul.f32 1.0, %v275
    %277 = vst [vmem:[#allocation10] sm:$0xff] %v261
    %278 = vst [vmem:[#allocation10 + $0x8] sm:$0xff] %v276
    // Predicated region
    $region34: #{tpu_custom_call.1} parent=1 // pred_check
      _
    $region35: #{tpu_custom_call.1} parent=1 // pred_check_branch
      %280 = sbr.rel (0) target = $region37
    $region36: #{tpu_custom_call.1} parent=1 // pred_region
      %282 = vsyncadd [#allocation6], 0
      %s283 = sshll.u32 [#allocation10], 4
      %s284 = int_to_ptr.vmem [resolvable:$true] %s283
      %s285 = sshll.u32 %s6, 4
      %s286 = int_to_ptr.hbm [resolvable:$true] %s285
      %291 = dma.vmem_to_hbm [thread:$0]  %s284, 256, %s286, [#allocation6], 128, 128, 8
    $region37: #{tpu_custom_call.1} parent=1 // pred_fallthru
      _
    // Predicated region
    $region38: #{tpu_custom_call.1} parent=1 // pred_check
      _
    $region39: #{tpu_custom_call.1} parent=1 // pred_check_branch
      %293 = sbr.rel (0) target = $region41
    $region40: #{tpu_custom_call.1} parent=1 // pred_region
      %295 = dma.done [#allocation6], 256
    $region41: #{tpu_custom_call.1} parent=1 // pred_fallthru
      _
    %296 = vsyncpa [#allocation5], 1
    %297 = vsyncpa [#allocation8], 1
    %298 = vsyncpa [#allocation6], 1

</llo_original>
